<compile_context>
chip_gen: v7x
topology: tpu7x:2x2x1
jax: 0.10.0
libtpu: 0.0.40
codegen_flags: <defaults>
</compile_context>

<pallas_src>
import jax
import jax.numpy as jnp
from jax.experimental import pallas as pl
from jax.experimental.pallas import tpu as pltpu


def _round_up(n, m):
    return ((n + m - 1) // m) * m


def _mix32(x):
    # "lowbias32" integer finalizer: good avalanche, pure VPU int ops.
    x = x ^ (x >> 16)
    x = x * jnp.uint32(0x7FEB352D)
    x = x ^ (x >> 15)
    x = x * jnp.uint32(0x846CA68B)
    x = x ^ (x >> 16)
    return x


def _randn_kernel(seed_ref, out_ref):
    """Fill out_ref (TB, W) with iid N(0,1) via counter-hash + Box-Muller."""
    tb, w = out_ref.shape
    tile = pl.program_id(0)

    # Global per-element counter (distinct across grid tiles by construction).
    row = jax.lax.broadcasted_iota(jnp.int32, (tb, w), 0) + tile * tb
    col = jax.lax.broadcasted_iota(jnp.int32, (tb, w), 1)
    cnt = (row * w + col).astype(jnp.uint32)

    seed_u = seed_ref[0].astype(jnp.uint32)
    h1 = _mix32(cnt ^ (seed_u * jnp.uint32(0x9E3779B9)) ^ jnp.uint32(0x85EBCA6B))
    h2 = _mix32(cnt ^ (seed_u * jnp.uint32(0xC2B2AE35)) ^ jnp.uint32(0x27D4EB2F))

    # 23-bit uniforms; u1 in (0,1) so log() is safe, u2 in [0,1).
    inv = jnp.float32(1.0 / (1 << 23))
    u1 = ((h1 >> 9).astype(jnp.int32).astype(jnp.float32) + 0.5) * inv
    u2 = (h2 >> 9).astype(jnp.int32).astype(jnp.float32) * inv

    # Box-Muller (EUP-bound: log + sqrt + cos per element).
    r = jnp.sqrt(-2.0 * jnp.log(u1))
    out_ref[...] = r * jnp.cos(jnp.float32(6.283185307179586) * u2)


def mockup_forward(x, num_classes, seed=0, force_pallas=False):
    """Equivalent of Mockup(num_classes).forward(x) — deterministic given `seed`."""
    b = x.shape[0]

    # Tiny batches: fixed pallas_call launch/DMA overhead dwarfs the work; let
    # XLA's fused RNG handle it unless the kernel path is explicitly requested.
    if not force_pallas and b < 1024:
        kf, kl = jax.random.split(jax.random.PRNGKey(seed))
        return (jax.random.normal(kf, (b, 512), jnp.float32),
                jax.random.normal(kl, (b, num_classes), jnp.float32))

    # Fused lane-dense output: 512 feature lanes + num_classes padded to 128.
    w = 512 + _round_up(max(num_classes, 1), 128)
    tb = min(1024, _round_up(b, 8))          # rows per tile (multiple of 8)
    padded_b = _round_up(b, tb)
    grid = (padded_b // tb,)

    seed_arr = jnp.asarray([seed], dtype=jnp.int32)

    out = pl.pallas_call(
        _randn_kernel,
        out_shape=jax.ShapeDtypeStruct((padded_b, w), jnp.float32),
        grid_spec=pltpu.PrefetchScalarGridSpec(
            num_scalar_prefetch=1,           # seed lands in SMEM
            grid=grid,
            in_specs=[],
            out_specs=pl.BlockSpec((tb, w), lambda i, seed_ref: (i, 0)),
        ),
        compiler_params=pltpu.CompilerParams(
            dimension_semantics=("parallel",),
        ),
        cost_estimate=pl.CostEstimate(
            flops=15 * padded_b * w,
            transcendentals=3 * padded_b * w,
            bytes_accessed=4 * padded_b * w,
        ),
    )(seed_arr)

    feat = out[:b, :512]
    logits = out[:b, 512:512 + num_classes]
    return feat, logits


if __name__ == "__main__":
    num_classes = 10
    batch, channels, spatial = 2, 4, 16

    key = jax.random.PRNGKey(0)
    # NCHW input, contents irrelevant to the module's semantics.
    x = jax.random.normal(key, (batch, channels, spatial, spatial), dtype=jnp.float32)

    # Force the Pallas path so the kernel itself is exercised at this tiny B.
    feat, logits = mockup_forward(x, num_classes, seed=0, force_pallas=True)
    jax.block_until_ready((feat, logits))

    assert feat.shape == (batch, 512) and feat.dtype == jnp.float32
    assert logits.shape == (batch, num_classes) and logits.dtype == jnp.float32
    # Sanity: finite, roughly standard-normal (1024 feature samples).
    assert bool(jnp.all(jnp.isfinite(feat))) and bool(jnp.all(jnp.isfinite(logits)))
    m = float(jnp.mean(feat))
    s = float(jnp.std(feat))
    assert abs(m) < 0.2 and 0.8 < s < 1.2
    assert float(jnp.std(logits)) > 0.1

    print("KERNEL_OK")
</pallas_src>

<mosaic_0001>
module attributes {stable_mosaic.version = 11 : i64} {
  func.func @_randn_kernel(%arg0: i32, %arg1: memref<1xi32, #tpu.memory_space<smem>>, %arg2: memref<8x640xf32, #tpu.memory_space<vmem>>) attributes {dimension_semantics = [#tpu.dimension_semantics<parallel>], iteration_bounds = array<i64: 1>, scalar_prefetch = 1 : i64, scratch_operands = 0 : i64, tpu.core_type = #tpu.core_type<tc>, window_params = [{transform_indices = @transform_0, window_bounds = array<i64: 8, 640>}]} {
    %0 = tpu.iota {dimensions = array<i32: 0>} : vector<8x640xi32>
    %c8_i32 = arith.constant 8 : i32
    %1 = arith.muli %arg0, %c8_i32 : i32
    %2 = vector.broadcast %1 : i32 to vector<8x640xi32>
    %3 = arith.addi %0, %2 : vector<8x640xi32>
    %4 = tpu.iota {dimensions = array<i32: 1>} : vector<8x640xi32>
    %c640_i32 = arith.constant 640 : i32
    %5 = vector.broadcast %c640_i32 : i32 to vector<8x640xi32>
    %6 = arith.muli %3, %5 : vector<8x640xi32>
    %7 = arith.addi %6, %4 : vector<8x640xi32>
    %c0 = arith.constant 0 : index
    %8 = memref.load %arg1[%c0] : memref<1xi32, #tpu.memory_space<smem>>
    %c-1640531527_i32 = arith.constant -1640531527 : i32
    %9 = arith.muli %8, %c-1640531527_i32 : i32
    %10 = vector.broadcast %9 : i32 to vector<8x640xi32>
    %11 = arith.xori %7, %10 : vector<8x640xi32>
    %c-2048144789_i32 = arith.constant -2048144789 : i32
    %12 = vector.broadcast %c-2048144789_i32 : i32 to vector<8x640xi32>
    %13 = arith.xori %11, %12 : vector<8x640xi32>
    %c16_i32 = arith.constant 16 : i32
    %14 = vector.broadcast %c16_i32 : i32 to vector<8x640xi32>
    %15 = arith.shrui %13, %14 : vector<8x640xi32>
    %16 = arith.xori %13, %15 : vector<8x640xi32>
    %c2146121005_i32 = arith.constant 2146121005 : i32
    %17 = vector.broadcast %c2146121005_i32 : i32 to vector<8x640xi32>
    %18 = arith.muli %16, %17 : vector<8x640xi32>
    %c15_i32 = arith.constant 15 : i32
    %19 = vector.broadcast %c15_i32 : i32 to vector<8x640xi32>
    %20 = arith.shrui %18, %19 : vector<8x640xi32>
    %21 = arith.xori %18, %20 : vector<8x640xi32>
    %c-2073254261_i32 = arith.constant -2073254261 : i32
    %22 = vector.broadcast %c-2073254261_i32 : i32 to vector<8x640xi32>
    %23 = arith.muli %21, %22 : vector<8x640xi32>
    %c16_i32_0 = arith.constant 16 : i32
    %24 = vector.broadcast %c16_i32_0 : i32 to vector<8x640xi32>
    %25 = arith.shrui %23, %24 : vector<8x640xi32>
    %26 = arith.xori %23, %25 : vector<8x640xi32>
    %c-1028477387_i32 = arith.constant -1028477387 : i32
    %27 = arith.muli %8, %c-1028477387_i32 : i32
    %28 = vector.broadcast %27 : i32 to vector<8x640xi32>
    %29 = arith.xori %7, %28 : vector<8x640xi32>
    %c668265263_i32 = arith.constant 668265263 : i32
    %30 = vector.broadcast %c668265263_i32 : i32 to vector<8x640xi32>
    %31 = arith.xori %29, %30 : vector<8x640xi32>
    %c16_i32_1 = arith.constant 16 : i32
    %32 = vector.broadcast %c16_i32_1 : i32 to vector<8x640xi32>
    %33 = arith.shrui %31, %32 : vector<8x640xi32>
    %34 = arith.xori %31, %33 : vector<8x640xi32>
    %c2146121005_i32_2 = arith.constant 2146121005 : i32
    %35 = vector.broadcast %c2146121005_i32_2 : i32 to vector<8x640xi32>
    %36 = arith.muli %34, %35 : vector<8x640xi32>
    %c15_i32_3 = arith.constant 15 : i32
    %37 = vector.broadcast %c15_i32_3 : i32 to vector<8x640xi32>
    %38 = arith.shrui %36, %37 : vector<8x640xi32>
    %39 = arith.xori %36, %38 : vector<8x640xi32>
    %c-2073254261_i32_4 = arith.constant -2073254261 : i32
    %40 = vector.broadcast %c-2073254261_i32_4 : i32 to vector<8x640xi32>
    %41 = arith.muli %39, %40 : vector<8x640xi32>
    %c16_i32_5 = arith.constant 16 : i32
    %42 = vector.broadcast %c16_i32_5 : i32 to vector<8x640xi32>
    %43 = arith.shrui %41, %42 : vector<8x640xi32>
    %44 = arith.xori %41, %43 : vector<8x640xi32>
    %c9_i32 = arith.constant 9 : i32
    %45 = vector.broadcast %c9_i32 : i32 to vector<8x640xi32>
    %46 = arith.shrui %26, %45 : vector<8x640xi32>
    %47 = arith.sitofp %46 : vector<8x640xi32> to vector<8x640xf32>
    %cst = arith.constant 5.000000e-01 : f32
    %48 = vector.broadcast %cst : f32 to vector<8x640xf32>
    %49 = arith.addf %47, %48 : vector<8x640xf32>
    %cst_6 = arith.constant 1.1920929E-7 : f32
    %50 = vector.broadcast %cst_6 : f32 to vector<8x640xf32>
    %51 = arith.mulf %49, %50 : vector<8x640xf32>
    %c9_i32_7 = arith.constant 9 : i32
    %52 = vector.broadcast %c9_i32_7 : i32 to vector<8x640xi32>
    %53 = arith.shrui %44, %52 : vector<8x640xi32>
    %54 = arith.sitofp %53 : vector<8x640xi32> to vector<8x640xf32>
    %cst_8 = arith.constant 1.1920929E-7 : f32
    %55 = vector.broadcast %cst_8 : f32 to vector<8x640xf32>
    %56 = arith.mulf %54, %55 : vector<8x640xf32>
    %57 = math.log %51 : vector<8x640xf32>
    %cst_9 = arith.constant -2.000000e+00 : f32
    %58 = vector.broadcast %cst_9 : f32 to vector<8x640xf32>
    %59 = arith.mulf %58, %57 : vector<8x640xf32>
    %60 = math.sqrt %59 : vector<8x640xf32>
    %cst_10 = arith.constant 6.28318548 : f32
    %61 = vector.broadcast %cst_10 : f32 to vector<8x640xf32>
    %62 = arith.mulf %61, %56 : vector<8x640xf32>
    %63 = math.cos %62 : vector<8x640xf32>
    %64 = arith.mulf %60, %63 : vector<8x640xf32>
    %c0_11 = arith.constant 0 : index
    %c0_12 = arith.constant 0 : index
    %65 = vector.load %arg2[%c0_11, %c0_12] : memref<8x640xf32, #tpu.memory_space<vmem>>, vector<8x640xf32>
    tpu.vector_store %arg2[%c0_11, %c0_12], %64 {strides = array<i32>} : memref<8x640xf32, #tpu.memory_space<vmem>>, vector<8x640xf32>,
    return
  }
  func.func @transform_0(%arg0: i32, %arg1: memref<1xi32, #tpu.memory_space<smem>>) -> (i32, i32) {
    %c0_i32 = arith.constant 0 : i32
    %c0_i32_0 = arith.constant 0 : i32
    return %arg0, %c0_i32 : i32, i32
  }
}

</mosaic_0001>

<llo_original>
// kernel: tpu_custom_call.1
$region0: #{tpu_custom_call.1}
  #allocation0 [shape = 'u32[]', space=smem, size = 0x4, offset = 0x4, fixed_abs, tag = 'smem constant byte address 0x4 - core index']
  #allocation1 [shape = 'u32[144,128]{1,0:T(1,128)}', space=vmem, size = 0x12000, scoped, tag = 'internal scratch']
  #allocation2 [shape = 's32[1]{0}', space=sflag, size = 0x4, scoped, tag = 'scoped memory for tpu_custom_call.1']
  #allocation3 [shape = 's32[1]{0:T(128)S(6)}', space=smem, size = 0x200, scoped, tag = 'prefetched SMEM operand 0']
  %s0 = inlined_call_operand.<no memory space> [shape: s32[1], index: 0, kind: input, shape index: {}]
  %s1 = inlined_call_operand.hbm [shape: f32[8,640], index: 1, kind: output, shape index: {}]
  %s2 = sld [smem:[#allocation0]]
  $region10: #{tpu_custom_call.1} parent=0
    _
  %s4 = ssub.s32 1, %s2
  %s5 = scalar_select 0, %s4, %s2
  %6 = sst [smem:[#allocation3]] %s0
  $region1: #{tpu_custom_call.1} parent=0
    #allocation4 [shape = 'u8[20480]{0}', space=vmem, size = 0x5000, scoped, tag = 'output window, operand 0, single buffered']
    #allocation5 [shape = 's32[1]{0}', space=sflag, size = 0x4, scoped, tag = 'scoped memory for tpu_custom_call.1']
    %7 = vsyncpa [#allocation5], 0
    %v8 = vlaneseq
    %v9 = vshrl.u32 %v8, 7
    %s10 = smul.u32 0, 8
    %v11 = vstv %s10
    %v12 = vadd.s32 %v9, %v11
    %v13 = vlaneseq
    %v14 = vand.u32 %v13, 127
    %v15 = vadd.s32 %v14, 128
    %v16 = vadd.s32 %v14, 256
    %v17 = vadd.s32 %v14, 384
    %v18 = vadd.s32 %v14, 512
    %v19 = vmul.u32 %v12, 640
    %v20 = vadd.s32 %v19, %v14
    %v21 = vadd.s32 %v19, %v15
    %v22 = vadd.s32 %v19, %v16
    %v23 = vadd.s32 %v19, %v17
    %v24 = vadd.s32 %v19, %v18
    %s25 = sld [smem:[#allocation3]]
    %s26 = smul.u32 %s25, 2654435769
    %v27 = vstv %s26
    %v28 = vxor.u32 %v20, %v27
    %v29 = vxor.u32 %v21, %v27
    %v30 = vxor.u32 %v22, %v27
    %v31 = vxor.u32 %v23, %v27
    %v32 = vxor.u32 %v24, %v27
    %v33 = vxor.u32 %v28, 2246822507
    %v34 = vxor.u32 %v29, 2246822507
    %v35 = vxor.u32 %v30, 2246822507
    %v36 = vxor.u32 %v31, 2246822507
    %v37 = vxor.u32 %v32, 2246822507
    %v38 = vshrl.u32 %v33, 16
    %v39 = vshrl.u32 %v34, 16
    %v40 = vshrl.u32 %v35, 16
    %v41 = vshrl.u32 %v36, 16
    %v42 = vshrl.u32 %v37, 16
    %v43 = vxor.u32 %v33, %v38
    %v44 = vxor.u32 %v34, %v39
    %v45 = vxor.u32 %v35, %v40
    %v46 = vxor.u32 %v36, %v41
    %v47 = vxor.u32 %v37, %v42
    %v48 = vmul.u32 %v43, 2146121005
    %v49 = vmul.u32 %v44, 2146121005
    %v50 = vmul.u32 %v45, 2146121005
    %v51 = vmul.u32 %v46, 2146121005
    %v52 = vmul.u32 %v47, 2146121005
    %v53 = vshrl.u32 %v48, 15
    %v54 = vshrl.u32 %v49, 15
    %v55 = vshrl.u32 %v50, 15
    %v56 = vshrl.u32 %v51, 15
    %v57 = vshrl.u32 %v52, 15
    %v58 = vxor.u32 %v48, %v53
    %v59 = vxor.u32 %v49, %v54
    %v60 = vxor.u32 %v50, %v55
    %v61 = vxor.u32 %v51, %v56
    %v62 = vxor.u32 %v52, %v57
    %v63 = vmul.u32 %v58, 2221713035
    %v64 = vmul.u32 %v59, 2221713035
    %v65 = vmul.u32 %v60, 2221713035
    %v66 = vmul.u32 %v61, 2221713035
    %v67 = vmul.u32 %v62, 2221713035
    %v68 = vshrl.u32 %v63, 16
    %v69 = vshrl.u32 %v64, 16
    %v70 = vshrl.u32 %v65, 16
    %v71 = vshrl.u32 %v66, 16
    %v72 = vshrl.u32 %v67, 16
    %v73 = vxor.u32 %v63, %v68
    %v74 = vxor.u32 %v64, %v69
    %v75 = vxor.u32 %v65, %v70
    %v76 = vxor.u32 %v66, %v71
    %v77 = vxor.u32 %v67, %v72
    %s78 = smul.u32 %s25, 3266489909
    %v79 = vstv %s78
    %v80 = vxor.u32 %v20, %v79
    %v81 = vxor.u32 %v21, %v79
    %v82 = vxor.u32 %v22, %v79
    %v83 = vxor.u32 %v23, %v79
    %v84 = vxor.u32 %v24, %v79
    %v85 = vxor.u32 %v80, 668265263
    %v86 = vxor.u32 %v81, 668265263
    %v87 = vxor.u32 %v82, 668265263
    %v88 = vxor.u32 %v83, 668265263
    %v89 = vxor.u32 %v84, 668265263
    %v90 = vshrl.u32 %v85, 16
    %v91 = vshrl.u32 %v86, 16
    %v92 = vshrl.u32 %v87, 16
    %v93 = vshrl.u32 %v88, 16
    %v94 = vshrl.u32 %v89, 16
    %v95 = vxor.u32 %v85, %v90
    %v96 = vxor.u32 %v86, %v91
    %v97 = vxor.u32 %v87, %v92
    %v98 = vxor.u32 %v88, %v93
    %v99 = vxor.u32 %v89, %v94
    %v100 = vmul.u32 %v95, 2146121005
    %v101 = vmul.u32 %v96, 2146121005
    %v102 = vmul.u32 %v97, 2146121005
    %v103 = vmul.u32 %v98, 2146121005
    %v104 = vmul.u32 %v99, 2146121005
    %v105 = vshrl.u32 %v100, 15
    %v106 = vshrl.u32 %v101, 15
    %v107 = vshrl.u32 %v102, 15
    %v108 = vshrl.u32 %v103, 15
    %v109 = vshrl.u32 %v104, 15
    %v110 = vxor.u32 %v100, %v105
    %v111 = vxor.u32 %v101, %v106
    %v112 = vxor.u32 %v102, %v107
    %v113 = vxor.u32 %v103, %v108
    %v114 = vxor.u32 %v104, %v109
    %v115 = vmul.u32 %v110, 2221713035
    %v116 = vmul.u32 %v111, 2221713035
    %v117 = vmul.u32 %v112, 2221713035
    %v118 = vmul.u32 %v113, 2221713035
    %v119 = vmul.u32 %v114, 2221713035
    %v120 = vshrl.u32 %v115, 16
    %v121 = vshrl.u32 %v116, 16
    %v122 = vshrl.u32 %v117, 16
    %v123 = vshrl.u32 %v118, 16
    %v124 = vshrl.u32 %v119, 16
    %v125 = vxor.u32 %v115, %v120
    %v126 = vxor.u32 %v116, %v121
    %v127 = vxor.u32 %v117, %v122
    %v128 = vxor.u32 %v118, %v123
    %v129 = vxor.u32 %v119, %v124
    %v130 = vshrl.u32 %v73, 9
    %v131 = vshrl.u32 %v74, 9
    %v132 = vshrl.u32 %v75, 9
    %v133 = vshrl.u32 %v76, 9
    %v134 = vshrl.u32 %v77, 9
    %v135 = vcvt.s32.f32 %v130
    %v136 = vcvt.s32.f32 %v131
    %v137 = vcvt.s32.f32 %v132
    %v138 = vcvt.s32.f32 %v133
    %v139 = vcvt.s32.f32 %v134
    %v140 = vadd.f32 %v135, 0.5
    %v141 = vadd.f32 %v136, 0.5
    %v142 = vadd.f32 %v137, 0.5
    %v143 = vadd.f32 %v138, 0.5
    %v144 = vadd.f32 %v139, 0.5
    %v145 = vmul.f32 %v140, 1.1920929e-07
    %v146 = vmul.f32 %v141, 1.1920929e-07
    %v147 = vmul.f32 %v142, 1.1920929e-07
    %v148 = vmul.f32 %v143, 1.1920929e-07
    %v149 = vmul.f32 %v144, 1.1920929e-07
    %v150 = vshrl.u32 %v125, 9
    %v151 = vshrl.u32 %v126, 9
    %v152 = vshrl.u32 %v127, 9
    %v153 = vshrl.u32 %v128, 9
    %v154 = vshrl.u32 %v129, 9
    %v155 = vcvt.s32.f32 %v150
    %v156 = vcvt.s32.f32 %v151
    %v157 = vcvt.s32.f32 %v152
    %v158 = vcvt.s32.f32 %v153
    %v159 = vcvt.s32.f32 %v154
    %v160 = vmul.f32 %v155, 1.1920929e-07
    %v161 = vmul.f32 %v156, 1.1920929e-07
    %v162 = vmul.f32 %v157, 1.1920929e-07
    %v163 = vmul.f32 %v158, 1.1920929e-07
    %v164 = vmul.f32 %v159, 1.1920929e-07
    %v165 = vlog2.pop %v145
    %v166 = vmul.f32 %v165, 0.6931472
    %v167 = vlog2.pop %v146
    %v168 = vmul.f32 %v167, 0.6931472
    %v169 = vlog2.pop %v147
    %v170 = vmul.f32 %v169, 0.6931472
    %v171 = vlog2.pop %v148
    %v172 = vmul.f32 %v171, 0.6931472
    %v173 = vlog2.pop %v149
    %v174 = vmul.f32 %v173, 0.6931472
    %v175 = vmul.f32 %v166, -2.0
    %v176 = vmul.f32 %v168, -2.0
    %v177 = vmul.f32 %v170, -2.0
    %v178 = vmul.f32 %v172, -2.0
    %v179 = vmul.f32 %v174, -2.0
    %v180 = vrsqrt.pop %v175
    %v181 = vmul.f32 %v175, %v180
    %vm182 = vcmp.eq.f32.partialorder %v175, inf
    %v183 = vsel %vm182, %v175, %v181
    %vm184 = vcmp.eq.f32.partialorder %v175, 0.0
    %v185 = vand.u32 %v175, 2147483648
    %v186 = vsel %vm184, %v185, %v183
    %v187 = vrsqrt.pop %v176
    %v188 = vmul.f32 %v176, %v187
    %vm189 = vcmp.eq.f32.partialorder %v176, inf
    %v190 = vsel %vm189, %v176, %v188
    %vm191 = vcmp.eq.f32.partialorder %v176, 0.0
    %v192 = vand.u32 %v176, 2147483648
    %v193 = vsel %vm191, %v192, %v190
    %v194 = vrsqrt.pop %v177
    %v195 = vmul.f32 %v177, %v194
    %vm196 = vcmp.eq.f32.partialorder %v177, inf
    %v197 = vsel %vm196, %v177, %v195
    %vm198 = vcmp.eq.f32.partialorder %v177, 0.0
    %v199 = vand.u32 %v177, 2147483648
    %v200 = vsel %vm198, %v199, %v197
    %v201 = vrsqrt.pop %v178
    %v202 = vmul.f32 %v178, %v201
    %vm203 = vcmp.eq.f32.partialorder %v178, inf
    %v204 = vsel %vm203, %v178, %v202
    %vm205 = vcmp.eq.f32.partialorder %v178, 0.0
    %v206 = vand.u32 %v178, 2147483648
    %v207 = vsel %vm205, %v206, %v204
    %v208 = vrsqrt.pop %v179
    %v209 = vmul.f32 %v179, %v208
    %vm210 = vcmp.eq.f32.partialorder %v179, inf
    %v211 = vsel %vm210, %v179, %v209
    %vm212 = vcmp.eq.f32.partialorder %v179, 0.0
    %v213 = vand.u32 %v179, 2147483648
    %v214 = vsel %vm212, %v213, %v211
    %v215 = vmul.f32 %v160, 6.2831855
    %v216 = vmul.f32 %v161, 6.2831855
    %v217 = vmul.f32 %v162, 6.2831855
    %v218 = vmul.f32 %v163, 6.2831855
    %v219 = vmul.f32 %v164, 6.2831855
    %v220 = vand.u32 2147483647, %v215
    %vm221 = vcmp.le.f32.partialorder %v220, 0.7853982
    %vm222 = vcmp.lt.s32.totalorder %v215, 0
    %v223 = vand.u32 %v215, 2139095040
    %v224 = vshrl.u32 %v223, 23
    %v225 = vsub.s32 %v224, 127
    %v226 = vand.u32 2147483647, %v215
    %v227 = vand.u32 %v226, 8388607
    %v228 = vor.u32 %v227, 8388608
    %v229 = vsub.s32 0, %v228
    %v230 = vadd.s32 %v225, 1
    %vm231 = vcmp.gt.s32.totalorder %v230, 0
    %v232 = vsel %vm231, %v230, 0
    %v233 = vshrl.u32 %v232, 5
    %v234 = vand.u32 %v232, 31
    %v235 = vsub.s32 32, %v234
    %v236 = vshrl.u32 683565275, %v235
    %v237 = vshll.u32 683565275, %v234
    %v238 = vshrl.u32 2475754826, %v235
    %v239 = vor.u32 %v237, %v238
    %v240 = vshll.u32 2475754826, %v234
    %v241 = vshrl.u32 2131351028, %v235
    %v242 = vor.u32 %v240, %v241
    %v243 = vshll.u32 2131351028, %v234
    %v244 = vshrl.u32 2102212464, %v235
    %v245 = vor.u32 %v243, %v244
    %v246 = vshll.u32 2102212464, %v234
    %v247 = vshrl.u32 920167782, %v235
    %v248 = vor.u32 %v246, %v247
    %v249 = vshll.u32 920167782, %v234
    %v250 = vshrl.u32 1326507024, %v235
    %v251 = vor.u32 %v249, %v250
    %vm252 = vcmp.lt.s32.totalorder %v233, 1
    %vm253 = vcmp.lt.s32.totalorder %v233, 2
    %vm254 = vcmp.lt.s32.totalorder %v233, 3
    %vm255 = vcmp.lt.s32.totalorder %v233, 4
    %v256 = vsel %vm252, %v236, %v239
    %v257 = vsel %vm255, %v245, 2102212464
    %v258 = vsel %vm254, %v242, %v257
    %v259 = vsel %vm253, %v256, %v258
    %v260 = vsel %vm252, %v239, %v242
    %v261 = vsel %vm255, %v248, 920167782
    %v262 = vsel %vm254, %v245, %v261
    %v263 = vsel %vm253, %v260, %v262
    %v264 = vsel %vm252, %v242, %v245
    %v265 = vsel %vm255, %v251, 1326507024
    %v266 = vsel %vm254, %v248, %v265
    %v267 = vsel %vm253, %v264, %v266
    %v268 = vshll.u32 %v228, 8
    %v269 = vmul.u32.u64.compose %v268, %v267
    %v270 = vextract.low.u32 %v269
    %v271 = vextract.high.u32 %v269
    %v272 = vmul.u32.u64.compose %v268, %v263
    %v273 = vextract.low.u32 %v272
    %v274 = vextract.high.u32 %v272
    %v275 = vmul.u32 %v268, %v259
    %v276 = vadd.s32 %v271, %v273
    %vm277 = vc.u32 %v271, %v273
    %v278 = vadd.s32 %v274, 1
    %v279 = vsel %vm277, %v278, %v274
    %v280 = vadd.s32 %v275, %v279
    %v281 = vadd.s32 %v280, 536870912
    %v282 = vshrl.u32 %v281, 30
    %v283 = vshll.u32 %v282, 30
    %v284 = vsub.s32 %v280, %v283
    %vm285 = vcmp.lt.s32.totalorder %v284, 0
    %v286 = vsub.s32 0, %v284
    %v287 = vsel %vm285, %v286, %v284
    %v288 = vclz %v287
    %v289 = vsub.s32 %v288, 2
    %vm290 = vcmp.gt.s32.totalorder 0, %v289
    %v291 = vsel %vm290, 0, %v289
    %v292 = vsub.s32 32, %v291
    %v293 = vshll.u32 %v284, %v291
    %v294 = vshrl.u32 %v276, %v292
    %v295 = vor.u32 %v293, %v294
    %v296 = vsub.s32 4294967266, %v291
    %v297 = vadd.s32 %v296, 127
    %v298 = vshll.u32 %v297, 23
    %v299 = vor.u32 4788187, %v298
    %v300 = vand.u32 2147483647, %v299
    %v302 = vcvt.s32.f32 %v295
    %v303 = vmul.f32 %v302, %v300
    %v304 = vxor.u32 %v303, 2147483648
    %v305 = vsel %vm222, %v304, %v303
    %v306 = vsub.s32 4, %v282
    %v307 = vsel %vm222, %v306, %v282
    %v308 = vsel %vm221, %v215, %v305
    %v309 = vsel %vm221, 0, %v307
    %v310 = vcosq.f32.pop %v308
    %v311 = vsinq.f32.pop %v308
    %vm312 = vweird.f32 %v215
    %v313 = vand.u32 %v309, 3
    %vm314 = vcmp.lt.s32.totalorder %v313, 2
    %vm315 = vcmp.eq.s32.totalorder %v313, 0
    %v316 = vxor.u32 %v311, 2147483648
    %v317 = vsel %vm315, %v310, %v316
    %vm318 = vcmp.eq.s32.totalorder %v313, 2
    %v319 = vxor.u32 %v310, 2147483648
    %v320 = vsel %vm318, %v319, %v311
    %v321 = vsel %vm314, %v317, %v320
    %v322 = vsel %vm312, nan, %v321
    %v323 = vand.u32 2147483647, %v216
    %vm324 = vcmp.le.f32.partialorder %v323, 0.7853982
    %vm325 = vcmp.lt.s32.totalorder %v216, 0
    %v326 = vand.u32 %v216, 2139095040
    %v327 = vshrl.u32 %v326, 23
    %v328 = vsub.s32 %v327, 127
    %v329 = vand.u32 2147483647, %v216
    %v330 = vand.u32 %v329, 8388607
    %v331 = vor.u32 %v330, 8388608
    %v332 = vsub.s32 0, %v331
    %v333 = vadd.s32 %v328, 1
    %vm334 = vcmp.gt.s32.totalorder %v333, 0
    %v335 = vsel %vm334, %v333, 0
    %v336 = vshrl.u32 %v335, 5
    %v337 = vand.u32 %v335, 31
    %v338 = vsub.s32 32, %v337
    %v339 = vshrl.u32 683565275, %v338
    %v340 = vshll.u32 683565275, %v337
    %v341 = vshrl.u32 2475754826, %v338
    %v342 = vor.u32 %v340, %v341
    %v343 = vshll.u32 2475754826, %v337
    %v344 = vshrl.u32 2131351028, %v338
    %v345 = vor.u32 %v343, %v344
    %v346 = vshll.u32 2131351028, %v337
    %v347 = vshrl.u32 2102212464, %v338
    %v348 = vor.u32 %v346, %v347
    %v349 = vshll.u32 2102212464, %v337
    %v350 = vshrl.u32 920167782, %v338
    %v351 = vor.u32 %v349, %v350
    %v352 = vshll.u32 920167782, %v337
    %v353 = vshrl.u32 1326507024, %v338
    %v354 = vor.u32 %v352, %v353
    %vm355 = vcmp.lt.s32.totalorder %v336, 1
    %vm356 = vcmp.lt.s32.totalorder %v336, 2
    %vm357 = vcmp.lt.s32.totalorder %v336, 3
    %vm358 = vcmp.lt.s32.totalorder %v336, 4
    %v359 = vsel %vm355, %v339, %v342
    %v360 = vsel %vm358, %v348, 2102212464
    %v361 = vsel %vm357, %v345, %v360
    %v362 = vsel %vm356, %v359, %v361
    %v363 = vsel %vm355, %v342, %v345
    %v364 = vsel %vm358, %v351, 920167782
    %v365 = vsel %vm357, %v348, %v364
    %v366 = vsel %vm356, %v363, %v365
    %v367 = vsel %vm355, %v345, %v348
    %v368 = vsel %vm358, %v354, 1326507024
    %v369 = vsel %vm357, %v351, %v368
    %v370 = vsel %vm356, %v367, %v369
    %v371 = vshll.u32 %v331, 8
    %v372 = vmul.u32.u64.compose %v371, %v370
    %v373 = vextract.low.u32 %v372
    %v374 = vextract.high.u32 %v372
    %v375 = vmul.u32.u64.compose %v371, %v366
    %v376 = vextract.low.u32 %v375
    %v377 = vextract.high.u32 %v375
    %v378 = vmul.u32 %v371, %v362
    %v379 = vadd.s32 %v374, %v376
    %vm380 = vc.u32 %v374, %v376
    %v381 = vadd.s32 %v377, 1
    %v382 = vsel %vm380, %v381, %v377
    %v383 = vadd.s32 %v378, %v382
    %v384 = vadd.s32 %v383, 536870912
    %v385 = vshrl.u32 %v384, 30
    %v386 = vshll.u32 %v385, 30
    %v387 = vsub.s32 %v383, %v386
    %vm388 = vcmp.lt.s32.totalorder %v387, 0
    %v389 = vsub.s32 0, %v387
    %v390 = vsel %vm388, %v389, %v387
    %v391 = vclz %v390
    %v392 = vsub.s32 %v391, 2
    %vm393 = vcmp.gt.s32.totalorder 0, %v392
    %v394 = vsel %vm393, 0, %v392
    %v395 = vsub.s32 32, %v394
    %v396 = vshll.u32 %v387, %v394
    %v397 = vshrl.u32 %v379, %v395
    %v398 = vor.u32 %v396, %v397
    %v399 = vsub.s32 4294967266, %v394
    %v400 = vadd.s32 %v399, 127
    %v401 = vshll.u32 %v400, 23
    %v402 = vor.u32 4788187, %v401
    %v403 = vand.u32 2147483647, %v402
    %v405 = vcvt.s32.f32 %v398
    %v406 = vmul.f32 %v405, %v403
    %v407 = vxor.u32 %v406, 2147483648
    %v408 = vsel %vm325, %v407, %v406
    %v409 = vsub.s32 4, %v385
    %v410 = vsel %vm325, %v409, %v385
    %v411 = vsel %vm324, %v216, %v408
    %v412 = vsel %vm324, 0, %v410
    %v413 = vcosq.f32.pop %v411
    %v414 = vsinq.f32.pop %v411
    %vm415 = vweird.f32 %v216
    %v416 = vand.u32 %v412, 3
    %vm417 = vcmp.lt.s32.totalorder %v416, 2
    %vm418 = vcmp.eq.s32.totalorder %v416, 0
    %v419 = vxor.u32 %v414, 2147483648
    %v420 = vsel %vm418, %v413, %v419
    %vm421 = vcmp.eq.s32.totalorder %v416, 2
    %v422 = vxor.u32 %v413, 2147483648
    %v423 = vsel %vm421, %v422, %v414
    %v424 = vsel %vm417, %v420, %v423
    %v425 = vsel %vm415, nan, %v424
    %v426 = vand.u32 2147483647, %v217
    %vm427 = vcmp.le.f32.partialorder %v426, 0.7853982
    %vm428 = vcmp.lt.s32.totalorder %v217, 0
    %v429 = vand.u32 %v217, 2139095040
    %v430 = vshrl.u32 %v429, 23
    %v431 = vsub.s32 %v430, 127
    %v432 = vand.u32 2147483647, %v217
    %v433 = vand.u32 %v432, 8388607
    %v434 = vor.u32 %v433, 8388608
    %v435 = vsub.s32 0, %v434
    %v436 = vadd.s32 %v431, 1
    %vm437 = vcmp.gt.s32.totalorder %v436, 0
    %v438 = vsel %vm437, %v436, 0
    %v439 = vshrl.u32 %v438, 5
    %v440 = vand.u32 %v438, 31
    %v441 = vsub.s32 32, %v440
    %v442 = vshrl.u32 683565275, %v441
    %v443 = vshll.u32 683565275, %v440
    %v444 = vshrl.u32 2475754826, %v441
    %v445 = vor.u32 %v443, %v444
    %v446 = vshll.u32 2475754826, %v440
    %v447 = vshrl.u32 2131351028, %v441
    %v448 = vor.u32 %v446, %v447
    %v449 = vshll.u32 2131351028, %v440
    %v450 = vshrl.u32 2102212464, %v441
    %v451 = vor.u32 %v449, %v450
    %v452 = vshll.u32 2102212464, %v440
    %v453 = vshrl.u32 920167782, %v441
    %v454 = vor.u32 %v452, %v453
    %v455 = vshll.u32 920167782, %v440
    %v456 = vshrl.u32 1326507024, %v441
    %v457 = vor.u32 %v455, %v456
    %vm458 = vcmp.lt.s32.totalorder %v439, 1
    %vm459 = vcmp.lt.s32.totalorder %v439, 2
    %vm460 = vcmp.lt.s32.totalorder %v439, 3
    %vm461 = vcmp.lt.s32.totalorder %v439, 4
    %v462 = vsel %vm458, %v442, %v445
    %v463 = vsel %vm461, %v451, 2102212464
    %v464 = vsel %vm460, %v448, %v463
    %v465 = vsel %vm459, %v462, %v464
    %v466 = vsel %vm458, %v445, %v448
    %v467 = vsel %vm461, %v454, 920167782
    %v468 = vsel %vm460, %v451, %v467
    %v469 = vsel %vm459, %v466, %v468
    %v470 = vsel %vm458, %v448, %v451
    %v471 = vsel %vm461, %v457, 1326507024
    %v472 = vsel %vm460, %v454, %v471
    %v473 = vsel %vm459, %v470, %v472
    %v474 = vshll.u32 %v434, 8
    %v475 = vmul.u32.u64.compose %v474, %v473
    %v476 = vextract.low.u32 %v475
    %v477 = vextract.high.u32 %v475
    %v478 = vmul.u32.u64.compose %v474, %v469
    %v479 = vextract.low.u32 %v478
    %v480 = vextract.high.u32 %v478
    %v481 = vmul.u32 %v474, %v465
    %v482 = vadd.s32 %v477, %v479
    %vm483 = vc.u32 %v477, %v479
    %v484 = vadd.s32 %v480, 1
    %v485 = vsel %vm483, %v484, %v480
    %v486 = vadd.s32 %v481, %v485
    %v487 = vadd.s32 %v486, 536870912
    %v488 = vshrl.u32 %v487, 30
    %v489 = vshll.u32 %v488, 30
    %v490 = vsub.s32 %v486, %v489
    %vm491 = vcmp.lt.s32.totalorder %v490, 0
    %v492 = vsub.s32 0, %v490
    %v493 = vsel %vm491, %v492, %v490
    %v494 = vclz %v493
    %v495 = vsub.s32 %v494, 2
    %vm496 = vcmp.gt.s32.totalorder 0, %v495
    %v497 = vsel %vm496, 0, %v495
    %v498 = vsub.s32 32, %v497
    %v499 = vshll.u32 %v490, %v497
    %v500 = vshrl.u32 %v482, %v498
    %v501 = vor.u32 %v499, %v500
    %v502 = vsub.s32 4294967266, %v497
    %v503 = vadd.s32 %v502, 127
    %v504 = vshll.u32 %v503, 23
    %v505 = vor.u32 4788187, %v504
    %v506 = vand.u32 2147483647, %v505
    %v508 = vcvt.s32.f32 %v501
    %v509 = vmul.f32 %v508, %v506
    %v510 = vxor.u32 %v509, 2147483648
    %v511 = vsel %vm428, %v510, %v509
    %v512 = vsub.s32 4, %v488
    %v513 = vsel %vm428, %v512, %v488
    %v514 = vsel %vm427, %v217, %v511
    %v515 = vsel %vm427, 0, %v513
    %v516 = vcosq.f32.pop %v514
    %v517 = vsinq.f32.pop %v514
    %vm518 = vweird.f32 %v217
    %v519 = vand.u32 %v515, 3
    %vm520 = vcmp.lt.s32.totalorder %v519, 2
    %vm521 = vcmp.eq.s32.totalorder %v519, 0
    %v522 = vxor.u32 %v517, 2147483648
    %v523 = vsel %vm521, %v516, %v522
    %vm524 = vcmp.eq.s32.totalorder %v519, 2
    %v525 = vxor.u32 %v516, 2147483648
    %v526 = vsel %vm524, %v525, %v517
    %v527 = vsel %vm520, %v523, %v526
    %v528 = vsel %vm518, nan, %v527
    %v529 = vand.u32 2147483647, %v218
    %vm530 = vcmp.le.f32.partialorder %v529, 0.7853982
    %vm531 = vcmp.lt.s32.totalorder %v218, 0
    %v532 = vand.u32 %v218, 2139095040
    %v533 = vshrl.u32 %v532, 23
    %v534 = vsub.s32 %v533, 127
    %v535 = vand.u32 2147483647, %v218
    %v536 = vand.u32 %v535, 8388607
    %v537 = vor.u32 %v536, 8388608
    %v538 = vsub.s32 0, %v537
    %v539 = vadd.s32 %v534, 1
    %vm540 = vcmp.gt.s32.totalorder %v539, 0
    %v541 = vsel %vm540, %v539, 0
    %v542 = vshrl.u32 %v541, 5
    %v543 = vand.u32 %v541, 31
    %v544 = vsub.s32 32, %v543
    %v545 = vshrl.u32 683565275, %v544
    %v546 = vshll.u32 683565275, %v543
    %v547 = vshrl.u32 2475754826, %v544
    %v548 = vor.u32 %v546, %v547
    %v549 = vshll.u32 2475754826, %v543
    %v550 = vshrl.u32 2131351028, %v544
    %v551 = vor.u32 %v549, %v550
    %v552 = vshll.u32 2131351028, %v543
    %v553 = vshrl.u32 2102212464, %v544
    %v554 = vor.u32 %v552, %v553
    %v555 = vshll.u32 2102212464, %v543
    %v556 = vshrl.u32 920167782, %v544
    %v557 = vor.u32 %v555, %v556
    %v558 = vshll.u32 920167782, %v543
    %v559 = vshrl.u32 1326507024, %v544
    %v560 = vor.u32 %v558, %v559
    %vm561 = vcmp.lt.s32.totalorder %v542, 1
    %vm562 = vcmp.lt.s32.totalorder %v542, 2
    %vm563 = vcmp.lt.s32.totalorder %v542, 3
    %vm564 = vcmp.lt.s32.totalorder %v542, 4
    %v565 = vsel %vm561, %v545, %v548
    %v566 = vsel %vm564, %v554, 2102212464
    %v567 = vsel %vm563, %v551, %v566
    %v568 = vsel %vm562, %v565, %v567
    %v569 = vsel %vm561, %v548, %v551
    %v570 = vsel %vm564, %v557, 920167782
    %v571 = vsel %vm563, %v554, %v570
    %v572 = vsel %vm562, %v569, %v571
    %v573 = vsel %vm561, %v551, %v554
    %v574 = vsel %vm564, %v560, 1326507024
    %v575 = vsel %vm563, %v557, %v574
    %v576 = vsel %vm562, %v573, %v575
    %v577 = vshll.u32 %v537, 8
    %v578 = vmul.u32.u64.compose %v577, %v576
    %v579 = vextract.low.u32 %v578
    %v580 = vextract.high.u32 %v578
    %v581 = vmul.u32.u64.compose %v577, %v572
    %v582 = vextract.low.u32 %v581
    %v583 = vextract.high.u32 %v581
    %v584 = vmul.u32 %v577, %v568
    %v585 = vadd.s32 %v580, %v582
    %vm586 = vc.u32 %v580, %v582
    %v587 = vadd.s32 %v583, 1
    %v588 = vsel %vm586, %v587, %v583
    %v589 = vadd.s32 %v584, %v588
    %v590 = vadd.s32 %v589, 536870912
    %v591 = vshrl.u32 %v590, 30
    %v592 = vshll.u32 %v591, 30
    %v593 = vsub.s32 %v589, %v592
    %vm594 = vcmp.lt.s32.totalorder %v593, 0
    %v595 = vsub.s32 0, %v593
    %v596 = vsel %vm594, %v595, %v593
    %v597 = vclz %v596
    %v598 = vsub.s32 %v597, 2
    %vm599 = vcmp.gt.s32.totalorder 0, %v598
    %v600 = vsel %vm599, 0, %v598
    %v601 = vsub.s32 32, %v600
    %v602 = vshll.u32 %v593, %v600
    %v603 = vshrl.u32 %v585, %v601
    %v604 = vor.u32 %v602, %v603
    %v605 = vsub.s32 4294967266, %v600
    %v606 = vadd.s32 %v605, 127
    %v607 = vshll.u32 %v606, 23
    %v608 = vor.u32 4788187, %v607
    %v609 = vand.u32 2147483647, %v608
    %v611 = vcvt.s32.f32 %v604
    %v612 = vmul.f32 %v611, %v609
    %v613 = vxor.u32 %v612, 2147483648
    %v614 = vsel %vm531, %v613, %v612
    %v615 = vsub.s32 4, %v591
    %v616 = vsel %vm531, %v615, %v591
    %v617 = vsel %vm530, %v218, %v614
    %v618 = vsel %vm530, 0, %v616
    %v619 = vcosq.f32.pop %v617
    %v620 = vsinq.f32.pop %v617
    %vm621 = vweird.f32 %v218
    %v622 = vand.u32 %v618, 3
    %vm623 = vcmp.lt.s32.totalorder %v622, 2
    %vm624 = vcmp.eq.s32.totalorder %v622, 0
    %v625 = vxor.u32 %v620, 2147483648
    %v626 = vsel %vm624, %v619, %v625
    %vm627 = vcmp.eq.s32.totalorder %v622, 2
    %v628 = vxor.u32 %v619, 2147483648
    %v629 = vsel %vm627, %v628, %v620
    %v630 = vsel %vm623, %v626, %v629
    %v631 = vsel %vm621, nan, %v630
    %v632 = vand.u32 2147483647, %v219
    %vm633 = vcmp.le.f32.partialorder %v632, 0.7853982
    %vm634 = vcmp.lt.s32.totalorder %v219, 0
    %v635 = vand.u32 %v219, 2139095040
    %v636 = vshrl.u32 %v635, 23
    %v637 = vsub.s32 %v636, 127
    %v638 = vand.u32 2147483647, %v219
    %v639 = vand.u32 %v638, 8388607
    %v640 = vor.u32 %v639, 8388608
    %v641 = vsub.s32 0, %v640
    %v642 = vadd.s32 %v637, 1
    %vm643 = vcmp.gt.s32.totalorder %v642, 0
    %v644 = vsel %vm643, %v642, 0
    %v645 = vshrl.u32 %v644, 5
    %v646 = vand.u32 %v644, 31
    %v647 = vsub.s32 32, %v646
    %v648 = vshrl.u32 683565275, %v647
    %v649 = vshll.u32 683565275, %v646
    %v650 = vshrl.u32 2475754826, %v647
    %v651 = vor.u32 %v649, %v650
    %v652 = vshll.u32 2475754826, %v646
    %v653 = vshrl.u32 2131351028, %v647
    %v654 = vor.u32 %v652, %v653
    %v655 = vshll.u32 2131351028, %v646
    %v656 = vshrl.u32 2102212464, %v647
    %v657 = vor.u32 %v655, %v656
    %v658 = vshll.u32 2102212464, %v646
    %v659 = vshrl.u32 920167782, %v647
    %v660 = vor.u32 %v658, %v659
    %v661 = vshll.u32 920167782, %v646
    %v662 = vshrl.u32 1326507024, %v647
    %v663 = vor.u32 %v661, %v662
    %vm664 = vcmp.lt.s32.totalorder %v645, 1
    %vm665 = vcmp.lt.s32.totalorder %v645, 2
    %vm666 = vcmp.lt.s32.totalorder %v645, 3
    %vm667 = vcmp.lt.s32.totalorder %v645, 4
    %v668 = vsel %vm664, %v648, %v651
    %v669 = vsel %vm667, %v657, 2102212464
    %v670 = vsel %vm666, %v654, %v669
    %v671 = vsel %vm665, %v668, %v670
    %v672 = vsel %vm664, %v651, %v654
    %v673 = vsel %vm667, %v660, 920167782
    %v674 = vsel %vm666, %v657, %v673
    %v675 = vsel %vm665, %v672, %v674
    %v676 = vsel %vm664, %v654, %v657
    %v677 = vsel %vm667, %v663, 1326507024
    %v678 = vsel %vm666, %v660, %v677
    %v679 = vsel %vm665, %v676, %v678
    %v680 = vshll.u32 %v640, 8
    %v681 = vmul.u32.u64.compose %v680, %v679
    %v682 = vextract.low.u32 %v681
    %v683 = vextract.high.u32 %v681
    %v684 = vmul.u32.u64.compose %v680, %v675
    %v685 = vextract.low.u32 %v684
    %v686 = vextract.high.u32 %v684
    %v687 = vmul.u32 %v680, %v671
    %v688 = vadd.s32 %v683, %v685
    %vm689 = vc.u32 %v683, %v685
    %v690 = vadd.s32 %v686, 1
    %v691 = vsel %vm689, %v690, %v686
    %v692 = vadd.s32 %v687, %v691
    %v693 = vadd.s32 %v692, 536870912
    %v694 = vshrl.u32 %v693, 30
    %v695 = vshll.u32 %v694, 30
    %v696 = vsub.s32 %v692, %v695
    %vm697 = vcmp.lt.s32.totalorder %v696, 0
    %v698 = vsub.s32 0, %v696
    %v699 = vsel %vm697, %v698, %v696
    %v700 = vclz %v699
    %v701 = vsub.s32 %v700, 2
    %vm702 = vcmp.gt.s32.totalorder 0, %v701
    %v703 = vsel %vm702, 0, %v701
    %v704 = vsub.s32 32, %v703
    %v705 = vshll.u32 %v696, %v703
    %v706 = vshrl.u32 %v688, %v704
    %v707 = vor.u32 %v705, %v706
    %v708 = vsub.s32 4294967266, %v703
    %v709 = vadd.s32 %v708, 127
    %v710 = vshll.u32 %v709, 23
    %v711 = vor.u32 4788187, %v710
    %v712 = vand.u32 2147483647, %v711
    %v714 = vcvt.s32.f32 %v707
    %v715 = vmul.f32 %v714, %v712
    %v716 = vxor.u32 %v715, 2147483648
    %v717 = vsel %vm634, %v716, %v715
    %v718 = vsub.s32 4, %v694
    %v719 = vsel %vm634, %v718, %v694
    %v720 = vsel %vm633, %v219, %v717
    %v721 = vsel %vm633, 0, %v719
    %v722 = vcosq.f32.pop %v720
    %v723 = vsinq.f32.pop %v720
    %vm724 = vweird.f32 %v219
    %v725 = vand.u32 %v721, 3
    %vm726 = vcmp.lt.s32.totalorder %v725, 2
    %vm727 = vcmp.eq.s32.totalorder %v725, 0
    %v728 = vxor.u32 %v723, 2147483648
    %v729 = vsel %vm727, %v722, %v728
    %vm730 = vcmp.eq.s32.totalorder %v725, 2
    %v731 = vxor.u32 %v722, 2147483648
    %v732 = vsel %vm730, %v731, %v723
    %v733 = vsel %vm726, %v729, %v732
    %v734 = vsel %vm724, nan, %v733
    %v735 = vmul.f32 %v186, %v322
    %v736 = vmul.f32 %v193, %v425
    %v737 = vmul.f32 %v200, %v528
    %v738 = vmul.f32 %v207, %v631
    %v739 = vmul.f32 %v214, %v734
    %740 = vst [vmem:[#allocation4] sm:$0xff] %v735
    %741 = vst [vmem:[#allocation4 + $0x8] sm:$0xff] %v736
    %742 = vst [vmem:[#allocation4 + $0x10] sm:$0xff] %v737
    %743 = vst [vmem:[#allocation4 + $0x18] sm:$0xff] %v738
    %744 = vst [vmem:[#allocation4 + $0x20] sm:$0xff] %v739
    // Predicated region
    $region2: #{tpu_custom_call.1} parent=1 // pred_check
      _
    $region3: #{tpu_custom_call.1} parent=1 // pred_check_branch
      %746 = sbr.rel (0) target = $region5
    $region4: #{tpu_custom_call.1} parent=1 // pred_region
      %s748 = ssub.s32 640, 640
      %749 = vsyncadd [#allocation5], %s748
      %s751 = sshll.u32 [#allocation4], 4
      %s752 = int_to_ptr.vmem [resolvable:$true] %s751
      %754 = dma.vmem_to_hbm [thread:$0]  %s752, 640, %s1, [#allocation5]
    $region5: #{tpu_custom_call.1} parent=1 // pred_fallthru
      _
    // Predicated region
    $region6: #{tpu_custom_call.1} parent=1 // pred_check
      _
    $region7: #{tpu_custom_call.1} parent=1 // pred_check_branch
      %756 = sbr.rel (0) target = $region9
    $region8: #{tpu_custom_call.1} parent=1 // pred_region
      %757 = dma.done [#allocation5], 640
    $region9: #{tpu_custom_call.1} parent=1 // pred_fallthru
      _
    %758 = vsyncpa [#allocation5], 1

</llo_original>
